<compile_context>
chip_gen: v7x
topology: tpu7x:2x2x1
jax: 0.10.0
libtpu: 0.0.40
codegen_flags: <defaults>
</compile_context>

<pallas_src>
import functools

import jax
import jax.numpy as jnp
from jax.experimental import pallas as pl
from jax.experimental.pallas import tpu as pltpu

N_ACTIONS = 2
N_STATES = 3
HIDDEN = 50

PAD_H = 128  # hidden width 50 -> 128 (lane aligned); only padded dimension


def _net_kernel(x_ref, w1_ref, b1_ref, w2_ref, b2_ref, out_ref):
    # x_ref:  [bb, 3]
    # w1_ref: [3, 128]    b1_ref: [1, 128]
    # w2_ref: [128, 2]    b2_ref: [1, 2]
    # out_ref:[bb, 2]
    h = jnp.dot(x_ref[...], w1_ref[...],
                preferred_element_type=jnp.float32) + b1_ref[...]
    h = jnp.maximum(h, 0.0)  # ReLU; padded hidden cols stay exactly 0
    out_ref[...] = jnp.dot(h, w2_ref[...],
                           preferred_element_type=jnp.float32) + b2_ref[...]


def _round_up(x, m):
    return ((x + m - 1) // m) * m


def _pad2d(a, rows, cols):
    r, c = a.shape
    return jnp.pad(a, ((0, rows - r), (0, cols - c)))


def prepare_params(w1, b1, w2, b2):
    """Zero-pad the hidden dim once (50 -> 128); reuse across calls.

    Expects weights in [in, out] layout (transposed vs. PyTorch's [out, in]):
      w1: [N_STATES, HIDDEN], b1: [HIDDEN], w2: [HIDDEN, N_ACTIONS], b2: [N_ACTIONS]
    """
    w1p = _pad2d(w1.astype(jnp.float32), N_STATES, PAD_H)          # [3, 128]
    b1p = _pad2d(b1.reshape(1, -1).astype(jnp.float32), 1, PAD_H)  # [1, 128]
    w2p = _pad2d(w2.astype(jnp.float32), PAD_H, N_ACTIONS)         # [128, 2]
    b2p = b2.reshape(1, -1).astype(jnp.float32)                    # [1, 2]
    return w1p, b1p, w2p, b2p


@functools.partial(jax.jit, static_argnames=("block_b",))
def net_forward(x, w1p, b1p, w2p, b2p, *, block_b=4096):
    """x: [B, N_STATES] f32 -> [B, N_ACTIONS] f32 (Linear -> ReLU -> Linear)."""
    B = x.shape[0]
    x = x.astype(jnp.float32)

    if B <= block_b:
        # Single gridless invocation: whole arrays live in VMEM, no pipeline
        # overhead, and no wrapper-side pad/slice at all.
        return pl.pallas_call(
            _net_kernel,
            out_shape=jax.ShapeDtypeStruct((B, N_ACTIONS), jnp.float32),
        )(x, w1p, b1p, w2p, b2p)

    # Large batch: tile the batch axis.  Balance tiles so there are at least
    # two (v7x has 2 TensorCores; "parallel" shards the grid across them) and
    # the padded tail is at most 7 rows.
    nb0 = max(2, pl.cdiv(B, block_b))
    bb = min(_round_up(pl.cdiv(B, nb0), 8), _round_up(block_b, 8))
    nb = pl.cdiv(B, bb)
    Bp = nb * bb
    if Bp != B:
        x = jnp.pad(x, ((0, Bp - B), (0, 0)))  # batch-row pad only (never lanes)

    # Advisory cost: this kernel is memory-bound.
    flops = 2 * Bp * (N_STATES * PAD_H + PAD_H * N_ACTIONS)
    bytes_accessed = 4 * (Bp * N_STATES + Bp * N_ACTIONS
                          + N_STATES * PAD_H + PAD_H
                          + PAD_H * N_ACTIONS + N_ACTIONS)

    out = pl.pallas_call(
        _net_kernel,
        out_shape=jax.ShapeDtypeStruct((Bp, N_ACTIONS), jnp.float32),
        grid=(nb,),
        in_specs=[
            pl.BlockSpec((bb, N_STATES), lambda i: (i, 0)),      # x batch tiles
            pl.BlockSpec((N_STATES, PAD_H), lambda i: (0, 0)),   # w1 (grid-invariant)
            pl.BlockSpec((1, PAD_H), lambda i: (0, 0)),          # b1
            pl.BlockSpec((PAD_H, N_ACTIONS), lambda i: (0, 0)),  # w2
            pl.BlockSpec((1, N_ACTIONS), lambda i: (0, 0)),      # b2
        ],
        out_specs=pl.BlockSpec((bb, N_ACTIONS), lambda i: (i, 0)),
        compiler_params=pltpu.CompilerParams(
            # Independent batch tiles -> shard across the 2 TCs on v7x
            # (measured no-op on v5e/v6e, harmless).
            dimension_semantics=("parallel",),
            # Safe on all generations (v5e/v6e phys 128 MiB, v7x phys 64 MiB);
            # default block_b=4096 only needs ~9 MiB of double-buffered tiles.
            vmem_limit_bytes=32 * 1024 * 1024,
        ),
        cost_estimate=pl.CostEstimate(
            flops=flops, transcendentals=0, bytes_accessed=bytes_accessed),
    )(x, w1p, b1p, w2p, b2p)
    return out[:B] if Bp != B else out


def init_params(key):
    """Synthetic init mirroring the PyTorch module:
    weights ~ N(0, 0.1); biases ~ U(-1/sqrt(fan_in), 1/sqrt(fan_in)).
    Weights are returned already transposed to [in, out]."""
    k1, k2, k3, k4 = jax.random.split(key, 4)
    w1 = (jax.random.normal(k1, (HIDDEN, N_STATES), jnp.float32) * 0.1).T
    b1 = jax.random.uniform(
        k2, (HIDDEN,), jnp.float32,
        minval=-1.0 / jnp.sqrt(float(N_STATES)),
        maxval=1.0 / jnp.sqrt(float(N_STATES)))
    w2 = (jax.random.normal(k3, (N_ACTIONS, HIDDEN), jnp.float32) * 0.1).T
    b2 = jax.random.uniform(
        k4, (N_ACTIONS,), jnp.float32,
        minval=-1.0 / jnp.sqrt(float(HIDDEN)),
        maxval=1.0 / jnp.sqrt(float(HIDDEN)))
    return w1, b1, w2, b2


if __name__ == "__main__":
    key = jax.random.PRNGKey(0)
    k_params, k_x1, k_x2 = jax.random.split(key, 3)

    w1, b1, w2, b2 = init_params(k_params)
    padded = prepare_params(w1, b1, w2, b2)

    def ref_fn(xx):
        return jnp.maximum(xx @ w1 + b1, 0.0) @ w2 + b2

    # Small batch (typical DQN minibatch) -> gridless single-invocation path.
    B = 32
    x = jax.random.normal(k_x1, (B, N_STATES), jnp.float32)
    out = jax.block_until_ready(net_forward(x, *padded))
    assert out.shape == (B, N_ACTIONS)
    assert jnp.allclose(out, ref_fn(x), atol=1e-4, rtol=1e-4)

    # Batch larger than one tile (not a tile multiple) -> gridded "parallel"
    # path at the production default block_b (still only ~60 KB of data).
    B2 = 5000
    x2 = jax.random.normal(k_x2, (B2, N_STATES), jnp.float32)
    out2 = jax.block_until_ready(net_forward(x2, *padded))
    assert out2.shape == (B2, N_ACTIONS)
    assert jnp.allclose(out2, ref_fn(x2), atol=1e-4, rtol=1e-4)

    print("KERNEL_OK")
</pallas_src>

<mosaic_0001>
module attributes {stable_mosaic.version = 11 : i64} {
  func.func @_net_kernel(%arg0: memref<32x3xf32, #tpu.memory_space<vmem>>, %arg1: memref<3x128xf32, #tpu.memory_space<vmem>>, %arg2: memref<1x128xf32, #tpu.memory_space<vmem>>, %arg3: memref<128x2xf32, #tpu.memory_space<vmem>>, %arg4: memref<1x2xf32, #tpu.memory_space<vmem>>, %arg5: memref<32x2xf32, #tpu.memory_space<vmem>>) attributes {dimension_semantics = [], scalar_prefetch = 0 : i64, scratch_operands = 0 : i64, tpu.core_type = #tpu.core_type<tc>} {
    %c0 = arith.constant 0 : index
    %c0_0 = arith.constant 0 : index
    %0 = vector.load %arg0[%c0, %c0_0] : memref<32x3xf32, #tpu.memory_space<vmem>>, vector<32x3xf32>
    %c0_1 = arith.constant 0 : index
    %c0_2 = arith.constant 0 : index
    %1 = vector.load %arg1[%c0_1, %c0_2] : memref<3x128xf32, #tpu.memory_space<vmem>>, vector<3x128xf32>
    %cst = arith.constant dense<0.000000e+00> : vector<32x128xf32>
    %2 = tpu.matmul %0, %1, %cst {dimension_numbers = #tpu.dot_dimension_numbers<[1], [0], [0], [1], [0, 0, 1, 1], [], []>} : vector<32x3xf32>, vector<3x128xf32>, vector<32x128xf32> -> vector<32x128xf32>
    %c0_3 = arith.constant 0 : index
    %c0_4 = arith.constant 0 : index
    %3 = vector.load %arg2[%c0_3, %c0_4] : memref<1x128xf32, #tpu.memory_space<vmem>>, vector<1x128xf32>
    %4 = vector.broadcast %3 : vector<1x128xf32> to vector<32x128xf32>
    %5 = arith.addf %2, %4 : vector<32x128xf32>
    %cst_5 = arith.constant 0.000000e+00 : f32
    %6 = vector.broadcast %cst_5 : f32 to vector<32x128xf32>
    %7 = arith.maximumf %5, %6 : vector<32x128xf32>
    %c0_6 = arith.constant 0 : index
    %c0_7 = arith.constant 0 : index
    %8 = vector.load %arg3[%c0_6, %c0_7] : memref<128x2xf32, #tpu.memory_space<vmem>>, vector<128x2xf32>
    %cst_8 = arith.constant dense<0.000000e+00> : vector<32x2xf32>
    %9 = tpu.matmul %7, %8, %cst_8 {dimension_numbers = #tpu.dot_dimension_numbers<[1], [0], [0], [1], [0, 0, 1, 1], [], []>} : vector<32x128xf32>, vector<128x2xf32>, vector<32x2xf32> -> vector<32x2xf32>
    %c0_9 = arith.constant 0 : index
    %c0_10 = arith.constant 0 : index
    %10 = vector.load %arg4[%c0_9, %c0_10] : memref<1x2xf32, #tpu.memory_space<vmem>>, vector<1x2xf32>
    %11 = vector.broadcast %10 : vector<1x2xf32> to vector<32x2xf32>
    %12 = arith.addf %9, %11 : vector<32x2xf32>
    %c0_11 = arith.constant 0 : index
    %c0_12 = arith.constant 0 : index
    %13 = vector.load %arg5[%c0_11, %c0_12] : memref<32x2xf32, #tpu.memory_space<vmem>>, vector<32x2xf32>
    tpu.vector_store %arg5[%c0_11, %c0_12], %12 {strides = array<i32>} : memref<32x2xf32, #tpu.memory_space<vmem>>, vector<32x2xf32>,
    return
  }
}

</mosaic_0001>

<llo_original>
// kernel: net_forward.1
$region0: #{net_forward.1}
  #allocation0 [shape = 'u32[]', space=smem, size = 0x4, offset = 0x4, fixed_abs, tag = 'smem constant byte address 0x4 - core index']
  #allocation1 [shape = 'u32[144,128]{1,0:T(1,128)}', space=vmem, size = 0x12000, scoped, tag = 'internal scratch']
  %s0 = inlined_call_operand.vmem [shape: f32[32,3], index: 0, kind: input, shape index: {}]
  %s1 = inlined_call_operand.vmem [shape: f32[3,128], index: 1, kind: input, shape index: {}]
  %s2 = inlined_call_operand.vmem [shape: f32[1,128], index: 2, kind: input, shape index: {}]
  %s3 = inlined_call_operand.vmem [shape: f32[128,2], index: 3, kind: input, shape index: {}]
  %s4 = inlined_call_operand.vmem [shape: f32[1,2], index: 4, kind: input, shape index: {}]
  %s5 = inlined_call_operand.vmem [shape: f32[32,2], index: 5, kind: output, shape index: {}]
  %s6 = sld [smem:[#allocation0]]
  $region30: #{net_forward.1} parent=0
    _
  %s8 = ssub.s32 1, %s6
  %s9 = scalar_select 0, %s8, %s6
  // Predicated region
  $region2: #{net_forward.1} parent=0 // pred_check
    _
  $region3: #{net_forward.1} parent=0 // pred_check_branch
    %11 = sbr.rel (0) target = $region5
  $region4: #{net_forward.1} parent=0 // pred_region
    _
  $region5: #{net_forward.1} parent=0 // pred_fallthru
    _
  // Predicated region
  $region6: #{net_forward.1} parent=0 // pred_check
    _
  $region7: #{net_forward.1} parent=0 // pred_check_branch
    %13 = sbr.rel (0) target = $region9
  $region8: #{net_forward.1} parent=0 // pred_region
    _
  $region9: #{net_forward.1} parent=0 // pred_fallthru
    _
  // Predicated region
  $region10: #{net_forward.1} parent=0 // pred_check
    _
  $region11: #{net_forward.1} parent=0 // pred_check_branch
    %15 = sbr.rel (0) target = $region13
  $region12: #{net_forward.1} parent=0 // pred_region
    _
  $region13: #{net_forward.1} parent=0 // pred_fallthru
    _
  // Predicated region
  $region14: #{net_forward.1} parent=0 // pred_check
    _
  $region15: #{net_forward.1} parent=0 // pred_check_branch
    %17 = sbr.rel (0) target = $region17
  $region16: #{net_forward.1} parent=0 // pred_region
    _
  $region17: #{net_forward.1} parent=0 // pred_fallthru
    _
  // Predicated region
  $region18: #{net_forward.1} parent=0 // pred_check
    _
  $region19: #{net_forward.1} parent=0 // pred_check_branch
    %19 = sbr.rel (0) target = $region21
  $region20: #{net_forward.1} parent=0 // pred_region
    _
  $region21: #{net_forward.1} parent=0 // pred_fallthru
    _
  %v20 = vld [vmem:[%s0] sm:$0xff]
  %v21 = vld [vmem:[%s0 + $0x8] sm:$0xff]
  %v22 = vld [vmem:[%s0 + $0x10] sm:$0xff]
  %v23 = vld [vmem:[%s0 + $0x18] sm:$0xff]
  %v24 = vld [vmem:[%s1] sm:$0x7]
  %v25 = vld [vmem:[%s2] sm:$0x1]
  %v27 = vlaneseq
  %v28 = vshrl.u32 %v27, 7
  %v29 = vsub.s32 0, %v28
  %v30 = vrot.slane %v25, %v29
  %vm32 = vcmask 23552
  %v34 = vsel %vm32, %v20, 0
  %v37 = vsel %vm32, %v21, 0
  %v40 = vsel %vm32, %v22, 0
  %v43 = vsel %vm32, %v23, 0
  %vm45 = vcmask 1042432
  %v47 = vsel %vm45, %v24, 0
  %49 = vmatprep.subr.mxu0 0.0
  %50 = vmatpush1.msra.mxu0 %v47
  %51 = vmatprep.subr.mxu0 0.0
  %52 = vmatpush1.msra.mxu0 0.0
  %53 = vmatprep.subr.mxu0 0.0
  %54 = vmatpush1.msra.mxu0 0.0
  %55 = vmatprep.subr.mxu0 0.0
  %56 = vmatpush1.msra.mxu0 0.0
  %57 = vmatprep.subr.mxu0 0.0
  %58 = vmatpush1.msra.mxu0 0.0
  %59 = vmatprep.subr.mxu0 0.0
  %60 = vmatpush1.msra.mxu0 0.0
  %61 = vmatprep.subr.mxu0 0.0
  %62 = vmatpush1.msra.mxu0 0.0
  %63 = vmatprep.subr.mxu0 0.0
  %64 = vmatpush1.msra.mxu0 0.0
  %65 = vmatprep.subr.mxu0 0.0
  %66 = vmatpush1.msra.mxu0 0.0
  %67 = vmatprep.subr.mxu0 0.0
  %68 = vmatpush1.msra.mxu0 0.0
  %69 = vmatprep.subr.mxu0 0.0
  %70 = vmatpush1.msra.mxu0 0.0
  %71 = vmatprep.subr.mxu0 0.0
  %72 = vmatpush1.msra.mxu0 0.0
  %73 = vmatprep.subr.mxu0 0.0
  %74 = vmatpush1.msra.mxu0 0.0
  %75 = vmatprep.subr.mxu0 0.0
  %76 = vmatpush1.msra.mxu0 0.0
  %77 = vmatprep.subr.mxu0 0.0
  %78 = vmatpush1.msra.mxu0 0.0
  %79 = vmatprep.subr.mxu0 0.0
  %80 = vmatpush1.msra.mxu0 0.0
  %81 = vmatprep.subr.mxu0 0.0
  %82 = vmatpush1.msra.mxu0 0.0
  %83 = vmatprep.subr.mxu0 0.0
  %84 = vmatpush1.msra.mxu0 0.0
  %85 = vmatprep.subr.mxu0 0.0
  %86 = vmatpush1.msra.mxu0 0.0
  %87 = vmatprep.subr.mxu0 0.0
  %88 = vmatpush1.msra.mxu0 0.0
  %89 = vmatprep.subr.mxu0 0.0
  %90 = vmatpush1.msra.mxu0 0.0
  %91 = vmatprep.subr.mxu0 0.0
  %92 = vmatpush1.msra.mxu0 0.0
  %93 = vmatprep.subr.mxu0 0.0
  %94 = vmatpush1.msra.mxu0 0.0
  %95 = vmatprep.subr.mxu0 0.0
  %96 = vmatpush1.msra.mxu0 0.0
  %97 = vmatprep.subr.mxu0 0.0
  %98 = vmatpush1.msra.mxu0 0.0
  %99 = vmatprep.subr.mxu0 0.0
  %100 = vmatpush1.msra.mxu0 0.0
  %101 = vmatprep.subr.mxu0 0.0
  %102 = vmatpush1.msra.mxu0 0.0
  %103 = vmatprep.subr.mxu0 0.0
  %104 = vmatpush1.msra.mxu0 0.0
  %105 = vmatprep.subr.mxu0 0.0
  %106 = vmatpush1.msra.mxu0 0.0
  %107 = vmatprep.subr.mxu0 0.0
  %108 = vmatpush1.msra.mxu0 0.0
  %109 = vmatprep.subr.mxu0 0.0
  %110 = vmatpush1.msra.mxu0 0.0
  %111 = vmatprep.subr.mxu0 0.0
  %112 = vmatpush1.msra.mxu0 0.0
  %113 = vmatprep.mubr.f32.mxu0 0.0
  %114 = vmatmul.mubr.f32.gmra.mrb[0].mxu0 %v34
  %v115 = vpop.f32.mrb[0].mxu0
  %v116 = vadd.f32 %v30, %v115
  %v117 = vpop.f32.mrb[0].mxu0
  %118 = vmatprep.mubr.f32.mxu0 0.0
  %119 = vmatmul.mubr.f32.gmra.mrb[0].mxu0 %v37
  %v120 = vpop.f32.mrb[0].mxu0
  %v121 = vadd.f32 %v30, %v120
  %v122 = vpop.f32.mrb[0].mxu0
  %123 = vmatprep.mubr.f32.mxu0 0.0
  %124 = vmatmul.mubr.f32.gmra.mrb[0].mxu0 %v40
  %v125 = vpop.f32.mrb[0].mxu0
  %v126 = vadd.f32 %v30, %v125
  %v127 = vpop.f32.mrb[0].mxu0
  %128 = vmatprep.mubr.f32.mxu0 0.0
  %129 = vmatmul.mubr.f32.gmra.mrb[0].mxu0 %v43
  %v130 = vpop.f32.mrb[0].mxu0
  %v131 = vadd.f32 %v30, %v130
  %v132 = vpop.f32.mrb[0].mxu0
  %133 = vdwg.mxu0
  %v134 = vmax.f32 %v116, 0.0
  %v135 = vmax.f32 %v121, 0.0
  %v136 = vmax.f32 %v126, 0.0
  %v137 = vmax.f32 %v131, 0.0
  %v138 = vld [vmem:[%s3] sm:$0xff]
  %v139 = vld [vmem:[%s3 + $0x8] sm:$0xff]
  %v140 = vld [vmem:[%s3 + $0x10] sm:$0xff]
  %v141 = vld [vmem:[%s3 + $0x18] sm:$0xff]
  %v142 = vld [vmem:[%s3 + $0x20] sm:$0xff]
  %v143 = vld [vmem:[%s3 + $0x28] sm:$0xff]
  %v144 = vld [vmem:[%s3 + $0x30] sm:$0xff]
  %v145 = vld [vmem:[%s3 + $0x38] sm:$0xff]
  %v146 = vld [vmem:[%s3 + $0x40] sm:$0xff]
  %v147 = vld [vmem:[%s3 + $0x48] sm:$0xff]
  %v148 = vld [vmem:[%s3 + $0x50] sm:$0xff]
  %v149 = vld [vmem:[%s3 + $0x58] sm:$0xff]
  %v150 = vld [vmem:[%s3 + $0x60] sm:$0xff]
  %v151 = vld [vmem:[%s3 + $0x68] sm:$0xff]
  %v152 = vld [vmem:[%s3 + $0x70] sm:$0xff]
  %v153 = vld [vmem:[%s3 + $0x78] sm:$0xff]
  %v154 = vld [vmem:[%s4] sm:$0x1]
  %v156 = vlaneseq
  %v157 = vshrl.u32 %v156, 7
  %v158 = vsub.s32 0, %v157
  %v159 = vrot.slane %v154, %v158
  %161 = vmatprep.subr.mxu0 0.0
  %162 = vmatpush1.msra.mxu0 %v138
  %163 = vmatprep.subr.mxu0 0.0
  %164 = vmatpush1.msra.mxu0 %v139
  %165 = vmatprep.subr.mxu0 0.0
  %166 = vmatpush1.msra.mxu0 %v140
  %167 = vmatprep.subr.mxu0 0.0
  %168 = vmatpush1.msra.mxu0 %v141
  %169 = vmatprep.subr.mxu0 0.0
  %170 = vmatpush1.msra.mxu0 %v142
  %171 = vmatprep.subr.mxu0 0.0
  %172 = vmatpush1.msra.mxu0 %v143
  %173 = vmatprep.subr.mxu0 0.0
  %174 = vmatpush1.msra.mxu0 %v144
  %175 = vmatprep.subr.mxu0 0.0
  %176 = vmatpush1.msra.mxu0 %v145
  %177 = vmatprep.subr.mxu0 0.0
  %178 = vmatpush1.msra.mxu0 %v146
  %179 = vmatprep.subr.mxu0 0.0
  %180 = vmatpush1.msra.mxu0 %v147
  %181 = vmatprep.subr.mxu0 0.0
  %182 = vmatpush1.msra.mxu0 %v148
  %183 = vmatprep.subr.mxu0 0.0
  %184 = vmatpush1.msra.mxu0 %v149
  %185 = vmatprep.subr.mxu0 0.0
  %186 = vmatpush1.msra.mxu0 %v150
  %187 = vmatprep.subr.mxu0 0.0
  %188 = vmatpush1.msra.mxu0 %v151
  %189 = vmatprep.subr.mxu0 0.0
  %190 = vmatpush1.msra.mxu0 %v152
  %191 = vmatprep.subr.mxu0 0.0
  %192 = vmatpush1.msra.mxu0 %v153
  %193 = vmatprep.subr.mxu0 0.0
  %194 = vmatpush1.msra.mxu0 0.0
  %195 = vmatprep.subr.mxu0 0.0
  %196 = vmatpush1.msra.mxu0 0.0
  %197 = vmatprep.subr.mxu0 0.0
  %198 = vmatpush1.msra.mxu0 0.0
  %199 = vmatprep.subr.mxu0 0.0
  %200 = vmatpush1.msra.mxu0 0.0
  %201 = vmatprep.subr.mxu0 0.0
  %202 = vmatpush1.msra.mxu0 0.0
  %203 = vmatprep.subr.mxu0 0.0
  %204 = vmatpush1.msra.mxu0 0.0
  %205 = vmatprep.subr.mxu0 0.0
  %206 = vmatpush1.msra.mxu0 0.0
  %207 = vmatprep.subr.mxu0 0.0
  %208 = vmatpush1.msra.mxu0 0.0
  %209 = vmatprep.subr.mxu0 0.0
  %210 = vmatpush1.msra.mxu0 0.0
  %211 = vmatprep.subr.mxu0 0.0
  %212 = vmatpush1.msra.mxu0 0.0
  %213 = vmatprep.subr.mxu0 0.0
  %214 = vmatpush1.msra.mxu0 0.0
  %215 = vmatprep.subr.mxu0 0.0
  %216 = vmatpush1.msra.mxu0 0.0
  %217 = vmatprep.subr.mxu0 0.0
  %218 = vmatpush1.msra.mxu0 0.0
  %219 = vmatprep.subr.mxu0 0.0
  %220 = vmatpush1.msra.mxu0 0.0
  %221 = vmatprep.subr.mxu0 0.0
  %222 = vmatpush1.msra.mxu0 0.0
  %223 = vmatprep.subr.mxu0 0.0
  %224 = vmatpush1.msra.mxu0 0.0
  %225 = vmatprep.mubr.f32.mxu0 0.0
  %226 = vmatmul.mubr.f32.gmra.mrb[0].mxu0 %v134
  %v227 = vpop.f32.mrb[0].mxu0
  %v228 = vadd.f32 %v159, %v227
  %v229 = vpop.f32.mrb[0].mxu0
  %230 = vmatprep.mubr.f32.mxu0 0.0
  %231 = vmatmul.mubr.f32.gmra.mrb[0].mxu0 %v135
  %v232 = vpop.f32.mrb[0].mxu0
  %v233 = vadd.f32 %v159, %v232
  %v234 = vpop.f32.mrb[0].mxu0
  %235 = vmatprep.mubr.f32.mxu0 0.0
  %236 = vmatmul.mubr.f32.gmra.mrb[0].mxu0 %v136
  %v237 = vpop.f32.mrb[0].mxu0
  %v238 = vadd.f32 %v159, %v237
  %v239 = vpop.f32.mrb[0].mxu0
  %240 = vmatprep.mubr.f32.mxu0 0.0
  %241 = vmatmul.mubr.f32.gmra.mrb[0].mxu0 %v137
  %v242 = vpop.f32.mrb[0].mxu0
  %v243 = vadd.f32 %v159, %v242
  %v244 = vpop.f32.mrb[0].mxu0
  %245 = vdwg.mxu0
  %vm246 = vcmask 15360
  %247 = vst.msk [vmem:[%s5] sm:$0xff] %vm246, %v228
  %248 = vst.msk [vmem:[%s5 + $0x8] sm:$0xff] %vm246, %v233
  %249 = vst.msk [vmem:[%s5 + $0x10] sm:$0xff] %vm246, %v238
  %250 = vst.msk [vmem:[%s5 + $0x18] sm:$0xff] %vm246, %v243
  // Predicated region
  $region22: #{net_forward.1} parent=0 // pred_check
    _
  $region23: #{net_forward.1} parent=0 // pred_check_branch
    %252 = sbr.rel (0) target = $region25
  $region24: #{net_forward.1} parent=0 // pred_region
    _
  $region25: #{net_forward.1} parent=0 // pred_fallthru
    _
  // Predicated region
  $region26: #{net_forward.1} parent=0 // pred_check
    _
  $region27: #{net_forward.1} parent=0 // pred_check_branch
    %254 = sbr.rel (0) target = $region29
  $region28: #{net_forward.1} parent=0 // pred_region
    _
  $region29: #{net_forward.1} parent=0 // pred_fallthru
    _

</llo_original>
